<compile_context>
chip_gen: v5e
topology: v5e:2x2
jax: 0.10.0
libtpu: 0.0.40
codegen_flags: <defaults>
</compile_context>

<pallas_src>
import jax
import jax.numpy as jnp
from jax.experimental import pallas as pl
from jax.experimental.pallas import tpu as pltpu


def cross_attention_kernel(x_ref, ye_ref, mask_ref, out_ref):
    # One grid step == TB batch rows.
    x = x_ref[...].astype(jnp.float32)          # (TB, S, Dx)
    ye = ye_ref[...].astype(jnp.float32)        # (TB, Dx)

    # scores[b, s] = sum_d x[b, s, d] * y_embed[b, d]
    # VPU multiply + cross-lane reduce; stays hidden under the x DMA.
    # TODO(synk): chunk the Dx reduction (fori_loop over 512-lane slabs) if
    # Dx grows large enough that the (TB,S,Dx) f32 temp pressures VMEM.
    scores = jnp.sum(x * ye[:, None, :], axis=-1)   # (TB, S)

    # masked_fill_(x_mask, -inf)
    mask = mask_ref[...] != 0                   # (TB, S)
    out_ref[...] = jnp.where(mask, -jnp.inf, scores).astype(out_ref.dtype)


def cross_attention_layer(x, y, x_mask, weight, bias, *, tb=None,
                          vmem_limit_bytes=64 * 1024 * 1024):
    """x: (B, S, Dx) f32, y: (B, Dy) f32, x_mask: (B, S) int (nonzero==masked),
    weight: (Dx, Dy) f32 (nn.Linear convention), bias: (Dx,) f32.
    Returns scores: (B, S) f32."""
    B, S, Dx = x.shape

    # Hoist the projection out of the kernel: one full-width MXU matmul in XLA.
    y_embed = (y @ weight.T + bias).astype(jnp.float32)      # (B, Dx)

    # Choose the batch tile TB: multiple of 8 (sublane-aligned output block),
    # sized so the double-buffered streamed tiles fit the VMEM budget, and
    # capped at the 8-padded batch so we don't pad more than necessary.
    if tb is None:
        bytes_per_batch_row = (S * Dx + Dx + 2 * S) * 4       # x + y_embed + mask + out
        budget = vmem_limit_bytes // 3                        # headroom for double buffers
        tb = budget // max(bytes_per_batch_row, 1)
        tb = max(8, min(256, (tb // 8) * 8))
    tb_cap = max(8, ((B + 7) // 8) * 8)
    tb = min(tb, tb_cap)

    # Pad batch up to a multiple of TB (padded rows are sliced off afterwards).
    Bp = ((B + tb - 1) // tb) * tb
    pad = Bp - B
    x_mask = x_mask.astype(jnp.int32)
    if pad:
        x = jnp.pad(x, ((0, pad), (0, 0), (0, 0)))
        y_embed = jnp.pad(y_embed, ((0, pad), (0, 0)))
        x_mask = jnp.pad(x_mask, ((0, pad), (0, 0)))

    grid = (Bp // tb,)

    scores = pl.pallas_call(
        cross_attention_kernel,
        out_shape=jax.ShapeDtypeStruct((Bp, S), jnp.float32),
        grid=grid,
        in_specs=[
            pl.BlockSpec((tb, S, Dx), lambda b: (b, 0, 0)),   # x (streamed)
            pl.BlockSpec((tb, Dx), lambda b: (b, 0)),         # y_embed
            pl.BlockSpec((tb, S), lambda b: (b, 0)),          # x_mask
        ],
        out_specs=pl.BlockSpec((tb, S), lambda b: (b, 0)),
        compiler_params=pltpu.CompilerParams(
            dimension_semantics=("parallel",),
            vmem_limit_bytes=vmem_limit_bytes,
        ),
    )(x, y_embed, x_mask)

    return scores[:B]


def _reference(x, y, x_mask, weight, bias):
    y_embed = y @ weight.T + bias                       # (B, Dx)
    scores = jnp.einsum("bsd,bd->bs", x, y_embed)       # (B, S)
    return jnp.where(x_mask != 0, -jnp.inf, scores)


if __name__ == "__main__":
    B, S, Dx, Dy = 2, 8, 32, 16

    key = jax.random.PRNGKey(0)
    kx, ky, kw, kb, km = jax.random.split(key, 5)

    x = jax.random.normal(kx, (B, S, Dx), dtype=jnp.float32)
    y = jax.random.normal(ky, (B, Dy), dtype=jnp.float32)
    # Deterministic Linear(y_size=Dy, x_size=Dx) params.
    weight = jax.random.normal(kw, (Dx, Dy), dtype=jnp.float32) * 0.1
    bias = jax.random.normal(kb, (Dx,), dtype=jnp.float32) * 0.1
    # Boolean mask (as int32 for the kernel); mask out a few positions.
    x_mask = (jax.random.uniform(km, (B, S)) > 0.7).astype(jnp.int32)

    out = cross_attention_layer(x, y, x_mask, weight, bias)
    out = jax.block_until_ready(out)

    ref = _reference(x, y, x_mask, weight, bias)
    assert out.shape == (B, S)
    assert bool(jnp.all(jnp.isclose(out, ref, atol=1e-5, rtol=1e-5))), (
        "mismatch vs pure-JAX reference"
    )
    print("KERNEL_OK")
</pallas_src>

<mosaic_0001>
module attributes {stable_mosaic.version = 11 : i64} {
  func.func @cross_attention_kernel(%arg0: i32, %arg1: memref<8x8x32xf32, #tpu.memory_space<vmem>>, %arg2: memref<8x32xf32, #tpu.memory_space<vmem>>, %arg3: memref<8x8xi32, #tpu.memory_space<vmem>>, %arg4: memref<8x8xf32, #tpu.memory_space<vmem>>) attributes {dimension_semantics = [#tpu.dimension_semantics<parallel>], iteration_bounds = array<i64: 1>, scalar_prefetch = 0 : i64, scratch_operands = 0 : i64, tpu.core_type = #tpu.core_type<tc>, window_params = [{transform_indices = @transform_0, window_bounds = array<i64: 8, 8, 32>}, {transform_indices = @transform_1, window_bounds = array<i64: 8, 32>}, {transform_indices = @transform_2, window_bounds = array<i64: 8, 8>}, {transform_indices = @transform_3, window_bounds = array<i64: 8, 8>}]} {
    %c0 = arith.constant 0 : index
    %c0_0 = arith.constant 0 : index
    %c0_1 = arith.constant 0 : index
    %0 = vector.load %arg1[%c0, %c0_0, %c0_1] : memref<8x8x32xf32, #tpu.memory_space<vmem>>, vector<8x8x32xf32>
    %c0_2 = arith.constant 0 : index
    %c0_3 = arith.constant 0 : index
    %1 = vector.load %arg2[%c0_2, %c0_3] : memref<8x32xf32, #tpu.memory_space<vmem>>, vector<8x32xf32>
    %2 = vector.shape_cast %1 : vector<8x32xf32> to vector<8x1x32xf32>
    %3 = vector.broadcast %2 : vector<8x1x32xf32> to vector<8x8x32xf32>
    %4 = arith.mulf %0, %3 : vector<8x8x32xf32>
    %cst = arith.constant dense<0.000000e+00> : vector<8x8xf32>
    %5 = vector.multi_reduction <add>, %4, %cst [2] : vector<8x8x32xf32> to vector<8x8xf32>
    %c0_4 = arith.constant 0 : index
    %c0_5 = arith.constant 0 : index
    %6 = vector.load %arg3[%c0_4, %c0_5] : memref<8x8xi32, #tpu.memory_space<vmem>>, vector<8x8xi32>
    %c0_i32 = arith.constant 0 : i32
    %7 = vector.broadcast %c0_i32 : i32 to vector<8x8xi32>
    %8 = arith.cmpi ne, %6, %7 : vector<8x8xi32>
    %cst_6 = arith.constant 0xFF800000 : f32
    %9 = vector.broadcast %cst_6 : f32 to vector<8x8xf32>
    %10 = arith.select %8, %9, %5 : vector<8x8xi1>, vector<8x8xf32>
    %c0_7 = arith.constant 0 : index
    %c0_8 = arith.constant 0 : index
    %11 = vector.load %arg4[%c0_7, %c0_8] : memref<8x8xf32, #tpu.memory_space<vmem>>, vector<8x8xf32>
    tpu.vector_store %arg4[%c0_7, %c0_8], %10 {strides = array<i32>} : memref<8x8xf32, #tpu.memory_space<vmem>>, vector<8x8xf32>,
    return
  }
  func.func @transform_0(%arg0: i32) -> (i32, i32, i32) {
    %c0_i32 = arith.constant 0 : i32
    %c0_i32_0 = arith.constant 0 : i32
    %c0_i32_1 = arith.constant 0 : i32
    return %arg0, %c0_i32, %c0_i32_0 : i32, i32, i32
  }
  func.func @transform_1(%arg0: i32) -> (i32, i32) {
    %c0_i32 = arith.constant 0 : i32
    %c0_i32_0 = arith.constant 0 : i32
    return %arg0, %c0_i32 : i32, i32
  }
  func.func @transform_2(%arg0: i32) -> (i32, i32) {
    %c0_i32 = arith.constant 0 : i32
    %c0_i32_0 = arith.constant 0 : i32
    return %arg0, %c0_i32 : i32, i32
  }
  func.func @transform_3(%arg0: i32) -> (i32, i32) {
    %c0_i32 = arith.constant 0 : i32
    %c0_i32_0 = arith.constant 0 : i32
    return %arg0, %c0_i32 : i32, i32
  }
}

</mosaic_0001>

<llo_original>
// kernel: tpu_custom_call.1
$region0: #{tpu_custom_call.1}
  #allocation0 [shape = 'u32[]', space=smem, size = 0x4, offset = 0x4, fixed_abs, tag = 'smem constant byte address 0x4 - core index']
  #allocation1 [shape = 'u32[72,128]{1,0:T(1,128)}', space=vmem, size = 0x9000, scoped, tag = 'internal scratch']
  %s0 = inlined_call_operand.hbm [shape: f32[8,8,32], index: 0, kind: input, shape index: {}]
  %s1 = inlined_call_operand.hbm [shape: f32[8,32], index: 1, kind: input, shape index: {}]
  %s2 = inlined_call_operand.hbm [shape: s32[8,8], index: 2, kind: input, shape index: {}]
  %s3 = inlined_call_operand.hbm [shape: f32[8,8], index: 3, kind: output, shape index: {}]
  %s4 = sld [smem:[#allocation0]]
  $region34: #{tpu_custom_call.1} parent=0
    _
  %s6 = ssub.s32 1, %s4
  %s7 = scalar_select 0, %s6, %s4
  $region1: #{tpu_custom_call.1} parent=0
    #allocation2 [shape = 'u8[32768]{0}', space=vmem, size = 0x8000, scoped, tag = 'input window, operand 0, single buffered']
    #allocation3 [shape = 's32[1]{0}', space=sflag, size = 0x4, scoped, tag = 'scoped memory for tpu_custom_call.1']
    #allocation4 [shape = 's32[1]{0}', space=sflag, size = 0x4, scoped, tag = 'scoped memory for tpu_custom_call.1']
    #allocation5 [shape = 'u8[4096]{0}', space=vmem, size = 0x1000, scoped, tag = 'input window, operand 1, single buffered']
    #allocation6 [shape = 's32[1]{0}', space=sflag, size = 0x4, scoped, tag = 'scoped memory for tpu_custom_call.1']
    #allocation7 [shape = 'u8[4096]{0}', space=vmem, size = 0x1000, scoped, tag = 'input window, operand 2, single buffered']
    #allocation8 [shape = 'u8[4096]{0}', space=vmem, size = 0x1000, scoped, tag = 'output window, operand 0, single buffered']
    %8 = vsyncpa [#allocation3], 0
    %9 = vsyncpa [#allocation6], 0
    %10 = vsyncpa [#allocation4], 0
    // Predicated region
    $region2: #{tpu_custom_call.1} parent=1 // pred_check
      _
    $region3: #{tpu_custom_call.1} parent=1 // pred_check_branch
      %12 = sbr.rel (0) target = $region5
    $region4: #{tpu_custom_call.1} parent=1 // pred_region
      %14 = vsyncadd [#allocation3], 0
      %s15 = sshll.u32 %s0, 4
      %s16 = int_to_ptr.hbm [resolvable:$true] %s15
      %s17 = sshll.u32 [#allocation2], 4
      %s18 = int_to_ptr.vmem [resolvable:$true] %s17
      %23 = dma.hbm_to_vmem [thread:$0]  %s16, 1024, %s18, [#allocation3], 128, 128, 8
    $region5: #{tpu_custom_call.1} parent=1 // pred_fallthru
      _
    // Predicated region
    $region6: #{tpu_custom_call.1} parent=1 // pred_check
      _
    $region7: #{tpu_custom_call.1} parent=1 // pred_check_branch
      %25 = sbr.rel (0) target = $region9
    $region8: #{tpu_custom_call.1} parent=1 // pred_region
      %27 = vsyncadd [#allocation6], 0
      %s29 = sshll.u32 %s1, 4
      %s30 = int_to_ptr.hbm [resolvable:$true] %s29
      %s31 = sshll.u32 [#allocation5], 4
      %s32 = int_to_ptr.vmem [resolvable:$true] %s31
      %34 = dma.hbm_to_vmem [thread:$0]  %s30, 128, %s32, [#allocation6]
    $region9: #{tpu_custom_call.1} parent=1 // pred_fallthru
      _
    // Predicated region
    $region10: #{tpu_custom_call.1} parent=1 // pred_check
      _
    $region11: #{tpu_custom_call.1} parent=1 // pred_check_branch
      %36 = sbr.rel (0) target = $region13
    $region12: #{tpu_custom_call.1} parent=1 // pred_region
      %38 = vsyncadd [#allocation6], 0
      %s40 = sshll.u32 %s2, 4
      %s41 = int_to_ptr.hbm [resolvable:$true] %s40
      %s42 = sshll.u32 [#allocation7], 4
      %s43 = int_to_ptr.vmem [resolvable:$true] %s42
      %45 = dma.hbm_to_vmem [thread:$0]  %s41, 128, %s43, [#allocation6]
    $region13: #{tpu_custom_call.1} parent=1 // pred_fallthru
      _
    // Predicated region
    $region14: #{tpu_custom_call.1} parent=1 // pred_check
      _
    $region15: #{tpu_custom_call.1} parent=1 // pred_check_branch
      %47 = sbr.rel (0) target = $region17
    $region16: #{tpu_custom_call.1} parent=1 // pred_region
      %49 = dma.done [#allocation3], 1024
    $region17: #{tpu_custom_call.1} parent=1 // pred_fallthru
      _
    // Predicated region
    $region18: #{tpu_custom_call.1} parent=1 // pred_check
      _
    $region19: #{tpu_custom_call.1} parent=1 // pred_check_branch
      %51 = sbr.rel (0) target = $region21
    $region20: #{tpu_custom_call.1} parent=1 // pred_region
      %53 = dma.done [#allocation6], 128
    $region21: #{tpu_custom_call.1} parent=1 // pred_fallthru
      _
    // Predicated region
    $region22: #{tpu_custom_call.1} parent=1 // pred_check
      _
    $region23: #{tpu_custom_call.1} parent=1 // pred_check_branch
      %55 = sbr.rel (0) target = $region25
    $region24: #{tpu_custom_call.1} parent=1 // pred_region
      %57 = dma.done [#allocation6], 128
    $region25: #{tpu_custom_call.1} parent=1 // pred_fallthru
      _
    %v58 = vld [vmem:[#allocation2] sm:$0xff]
    %v59 = vld [vmem:[#allocation2 + $0x8] sm:$0xff]
    %v60 = vld [vmem:[#allocation2 + $0x10] sm:$0xff]
    %v61 = vld [vmem:[#allocation2 + $0x18] sm:$0xff]
    %v62 = vld [vmem:[#allocation2 + $0x20] sm:$0xff]
    %v63 = vld [vmem:[#allocation2 + $0x28] sm:$0xff]
    %v64 = vld [vmem:[#allocation2 + $0x30] sm:$0xff]
    %v65 = vld [vmem:[#allocation2 + $0x38] sm:$0xff]
    %v66 = vld [vmem:[#allocation5] sm:$0xff]
    %v68 = vrot.slane %v66, 1
    %v69 = vrot.slane %v66, 2
    %v70 = vrot.slane %v66, 3
    %v71 = vrot.slane %v66, 4
    %v72 = vrot.slane %v66, 5
    %v73 = vrot.slane %v66, 6
    %v74 = vrot.slane %v66, 7
    %v75 = vperm.slane %v66, 0
    %v76 = vperm.slane %v68, 0
    %v77 = vperm.slane %v69, 0
    %v78 = vperm.slane %v70, 0
    %v79 = vperm.slane %v71, 0
    %v80 = vperm.slane %v72, 0
    %v81 = vperm.slane %v73, 0
    %v82 = vperm.slane %v74, 0
    %v91 = vmul.f32 %v58, %v75
    %v92 = vmul.f32 %v59, %v76
    %v93 = vmul.f32 %v60, %v77
    %v94 = vmul.f32 %v61, %v78
    %v95 = vmul.f32 %v62, %v79
    %v96 = vmul.f32 %v63, %v80
    %v97 = vmul.f32 %v64, %v81
    %v98 = vmul.f32 %v65, %v82
    %vm99 = vcmask 261120
    %v100 = vsel %vm99, %v91, 0.0
    %101 = vadd.xlane.f32.xlu0 %v100
    %v102 = vpop.xlane.xlu0 %101
    %v103 = vsel %vm99, %v92, 0.0
    %104 = vadd.xlane.f32.xlu0 %v103
    %v105 = vpop.xlane.xlu0 %104
    %v106 = vsel %vm99, %v93, 0.0
    %107 = vadd.xlane.f32.xlu0 %v106
    %v108 = vpop.xlane.xlu0 %107
    %v109 = vsel %vm99, %v94, 0.0
    %110 = vadd.xlane.f32.xlu0 %v109
    %v111 = vpop.xlane.xlu0 %110
    %v112 = vsel %vm99, %v95, 0.0
    %113 = vadd.xlane.f32.xlu0 %v112
    %v114 = vpop.xlane.xlu0 %113
    %v115 = vsel %vm99, %v96, 0.0
    %116 = vadd.xlane.f32.xlu0 %v115
    %v117 = vpop.xlane.xlu0 %116
    %v118 = vsel %vm99, %v97, 0.0
    %119 = vadd.xlane.f32.xlu0 %v118
    %v120 = vpop.xlane.xlu0 %119
    %v121 = vsel %vm99, %v98, 0.0
    %122 = vadd.xlane.f32.xlu0 %v121
    %v123 = vpop.xlane.xlu0 %122
    %v124 = vld [vmem:[#allocation7] sm:$0xff]
    %vm125 = vcmp.ne.s32.totalorder %v124, 0
    %v134 = vlaneseq
    %v135 = vand.u32 %v134, 127
    %v136 = vperm.slane %v102, %v135
    %v137 = vperm.slane %v105, %v135
    %v138 = vperm.slane %v108, %v135
    %v139 = vperm.slane %v111, %v135
    %v140 = vperm.slane %v114, %v135
    %v141 = vperm.slane %v117, %v135
    %v142 = vperm.slane %v120, %v135
    %v143 = vperm.slane %v123, %v135
    %vm144 = vcmask 1041409
    %v145 = vsel %vm144, %v137, %v136
    %vm146 = vcmask 1042434
    %v147 = vsel %vm146, %v138, %v145
    %vm148 = vcmask 1043459
    %v149 = vsel %vm148, %v139, %v147
    %vm150 = vcmask 1044484
    %v151 = vsel %vm150, %v140, %v149
    %vm152 = vcmask 1045509
    %v153 = vsel %vm152, %v141, %v151
    %vm154 = vcmask 1046534
    %v155 = vsel %vm154, %v142, %v153
    %vm156 = vcmask 1047559
    %v157 = vsel %vm156, %v143, %v155
    %v159 = vsel %vm125, -inf, %v157
    %vm160 = vcmask 64512
    %161 = vst.msk [vmem:[#allocation8] sm:$0xff] %vm160, %v159
    // Predicated region
    $region26: #{tpu_custom_call.1} parent=1 // pred_check
      _
    $region27: #{tpu_custom_call.1} parent=1 // pred_check_branch
      %163 = sbr.rel (0) target = $region29
    $region28: #{tpu_custom_call.1} parent=1 // pred_region
      %165 = vsyncadd [#allocation4], 0
      %s167 = sshll.u32 [#allocation8], 4
      %s168 = int_to_ptr.vmem [resolvable:$true] %s167
      %s169 = sshll.u32 %s3, 4
      %s170 = int_to_ptr.hbm [resolvable:$true] %s169
      %172 = dma.vmem_to_hbm [thread:$0]  %s168, 128, %s170, [#allocation4]
    $region29: #{tpu_custom_call.1} parent=1 // pred_fallthru
      _
    // Predicated region
    $region30: #{tpu_custom_call.1} parent=1 // pred_check
      _
    $region31: #{tpu_custom_call.1} parent=1 // pred_check_branch
      %174 = sbr.rel (0) target = $region33
    $region32: #{tpu_custom_call.1} parent=1 // pred_region
      %176 = dma.done [#allocation4], 128
    $region33: #{tpu_custom_call.1} parent=1 // pred_fallthru
      _
    %177 = vsyncpa [#allocation3], 1
    %178 = vsyncpa [#allocation6], 1
    %179 = vsyncpa [#allocation4], 1

</llo_original>
